<compile_context>
chip_gen: v5e
topology: v5e:2x2
jax: 0.10.0
libtpu: 0.0.40
codegen_flags: <defaults>
</compile_context>

<pallas_src>
import jax
import jax.numpy as jnp
from jax.experimental import pallas as pl
from jax.experimental.pallas import tpu as pltpu


def _round_up(v, m):
    return ((v + m - 1) // m) * m


# ---------------------------------------------------------------------------
# Kernel
# ---------------------------------------------------------------------------
def _mlp_diag_kernel(bounds_ref, x_ref, parms_ref, w_ref, out_ref):
    """One row-tile of the ParametricStateDiagonal forward.

    bounds_ref : SMEM (2,) f32        [lower, upper]
    x_ref      : VMEM (tb, n_dim)     primal estimates
    parms_ref  : VMEM (tb, parm_dim)  problem parameters
    w_ref      : VMEM (3, D, D)       packed / lane-padded weights, biases folded
    out_ref    : VMEM (tb, D)         bounded diagonal (first n_dim lanes valid)
    """
    n_dim = x_ref.shape[1]
    parm_dim = parms_ref.shape[1]
    input_dim = n_dim + parm_dim

    lower = bounds_ref[0]
    scale = bounds_ref[1] - bounds_ref[0]        # upper - lower (scalar, SMEM)

    w1 = w_ref[0]   # rows [0:n_dim]=W1_x, [n_dim:input_dim]=W1_p, row input_dim = b1 (+1-seed)
    w2 = w_ref[1]   # rows [0:hidden]=W2, row hidden = b2 (+1-propagation)
    w3 = w_ref[2]   # rows [0:hidden]=W3, row hidden = b3

    # Layer 1 (split GEMM avoids a wrapper-side concat) + bias row + ReLU.
    h = (jnp.dot(x_ref[...], w1[:n_dim, :], preferred_element_type=jnp.float32)
         + jnp.dot(parms_ref[...], w1[n_dim:input_dim, :],
                   preferred_element_type=jnp.float32)
         + w1[input_dim:input_dim + 1, :])
    h = jnp.maximum(h, 0.0)

    # Layers 2 & 3 -- biases folded via the constant-1 column at lane `hidden`.
    h = jnp.maximum(jnp.dot(h, w2, preferred_element_type=jnp.float32), 0.0)
    pd = jnp.dot(h, w3, preferred_element_type=jnp.float32)

    # Bounded diagonal; padded lanes hold junk that is sliced off outside.
    out_ref[...] = lower + jax.nn.sigmoid(pd) * scale


# ---------------------------------------------------------------------------
# Parameter packing (host-side, once)
# ---------------------------------------------------------------------------
def prepare_params(params, n_dim, parm_dim):
    """Pad & pack the 3 Linear layers into one (3, D, D) lane-aligned blob.

    Weights are stored (in_features, out_features) (PyTorch weight transposed).
    Biases are folded into an extra row; a constant-1 column (lane `hidden`)
    carries the bias contribution through layers 2 and 3.
    """
    w1, b1, w2, b2, w3, b3 = [jnp.asarray(a, jnp.float32) for a in params]
    hidden = w1.shape[1]
    input_dim = n_dim + parm_dim
    D = _round_up(max(hidden + 1, input_dim + 1, n_dim), 128)

    p1 = jnp.zeros((D, D), jnp.float32)
    p1 = p1.at[:input_dim, :hidden].set(w1)
    p1 = p1.at[input_dim, :hidden].set(b1)
    p1 = p1.at[input_dim, hidden].set(1.0)       # seed the constant-1 column

    p2 = jnp.zeros((D, D), jnp.float32)
    p2 = p2.at[:hidden, :hidden].set(w2)
    p2 = p2.at[hidden, :hidden].set(b2)
    p2 = p2.at[hidden, hidden].set(1.0)          # keep the constant-1 column alive

    p3 = jnp.zeros((D, D), jnp.float32)
    p3 = p3.at[:hidden, :n_dim].set(w3)
    p3 = p3.at[hidden, :n_dim].set(b3)

    return jnp.stack([p1, p2, p3])               # (3, D, D)


# ---------------------------------------------------------------------------
# Wrappers
# ---------------------------------------------------------------------------
@jax.jit
def _diag_vectors(x, parms, packed_w, bounds):
    """(B, n_dim), (B, parm_dim) -> (B, n_dim) bounded diagonal entries."""
    B, n_dim = x.shape
    parm_dim = parms.shape[1]
    D = packed_w.shape[-1]

    # Row-tile: big enough to amortize the ~0.35us/step overhead, multiple of 8.
    tb = 256 if B > 256 else _round_up(max(B, 1), 8)
    B_pad = _round_up(B, tb)

    x_p = jnp.zeros((B_pad, n_dim), jnp.float32).at[:B].set(x.astype(jnp.float32))
    p_p = jnp.zeros((B_pad, parm_dim), jnp.float32).at[:B].set(
        parms.astype(jnp.float32))

    out = pl.pallas_call(
        _mlp_diag_kernel,
        out_shape=jax.ShapeDtypeStruct((B_pad, D), jnp.float32),
        grid=(B_pad // tb,),
        in_specs=[
            pl.BlockSpec(memory_space=pltpu.MemorySpace.SMEM),   # bounds (2,)
            pl.BlockSpec((tb, n_dim), lambda i: (i, 0)),         # x rows
            pl.BlockSpec((tb, parm_dim), lambda i: (i, 0)),      # parm rows
            pl.BlockSpec((3, D, D), lambda i: (0, 0, 0)),        # weights (resident)
        ],
        out_specs=pl.BlockSpec((tb, D), lambda i: (i, 0)),       # lane-dense slab
        compiler_params=pltpu.CompilerParams(
            dimension_semantics=("parallel",)),
    )(bounds, x_p, p_p, packed_w)
    return out[:B, :n_dim]


def parametric_state_diagonal(x, parms, packed_w, lower_bound, upper_bound):
    """Single-sample forward matching the PyTorch module: returns (n_dim, n_dim)."""
    bounds = jnp.asarray([lower_bound, upper_bound], jnp.float32)
    diag_vec = _diag_vectors(x[None, :], parms[None, :], packed_w, bounds)[0]
    return jnp.diag(diag_vec)


def parametric_state_diagonal_batched(x, parms, packed_w, lower_bound, upper_bound):
    """Batched forward: (B, n_dim), (B, parm_dim) -> (B, n_dim, n_dim)."""
    bounds = jnp.asarray([lower_bound, upper_bound], jnp.float32)
    diag_vecs = _diag_vectors(x, parms, packed_w, bounds)
    return jax.vmap(jnp.diag)(diag_vecs)


# ---------------------------------------------------------------------------
# Synthetic params + pure-JAX reference
# ---------------------------------------------------------------------------
def init_params(key, n_dim, parm_dim):
    """Deterministic synthetic parameter init (shapes match the nn.Sequential)."""
    input_dim = parm_dim + n_dim
    hidden_dim = 10 * n_dim
    k1, k2, k3, k4, k5, k6 = jax.random.split(key, 6)
    # Weights stored (in_features, out_features) == transposed PyTorch layout.
    w1 = jax.random.normal(k1, (input_dim, hidden_dim), jnp.float32) * 0.1
    b1 = jax.random.normal(k2, (hidden_dim,), jnp.float32) * 0.1
    w2 = jax.random.normal(k3, (hidden_dim, hidden_dim), jnp.float32) * 0.1
    b2 = jax.random.normal(k4, (hidden_dim,), jnp.float32) * 0.1
    w3 = jax.random.normal(k5, (hidden_dim, n_dim), jnp.float32) * 0.1
    b3 = jax.random.normal(k6, (n_dim,), jnp.float32) * 0.1
    return (w1, b1, w2, b2, w3, b3)


def _reference(x, parms, params, lower, upper):
    """Pure-JAX reference of the PyTorch forward."""
    w1, b1, w2, b2, w3, b3 = params
    xsp = jnp.concatenate([x, parms], axis=-1)
    h = jnp.maximum(xsp @ w1 + b1, 0.0)
    h = jnp.maximum(h @ w2 + b2, 0.0)
    pd = h @ w3 + b3
    p_diag = lower + jax.nn.sigmoid(pd) * (upper - lower)
    return jnp.diag(p_diag)


if __name__ == "__main__":
    n_dim = 8
    parm_dim = 8
    lower_bound = 0.5
    upper_bound = 2.0

    key = jax.random.PRNGKey(0)
    kp, kx, ks, kbx, kbs = jax.random.split(key, 5)
    raw_params = init_params(kp, n_dim, parm_dim)
    packed_w = prepare_params(raw_params, n_dim, parm_dim)

    # --- single-sample (exact module semantics) --------------------------------
    x = jax.random.normal(kx, (n_dim,), jnp.float32)
    parms = jax.random.normal(ks, (parm_dim,), jnp.float32)
    Pm = parametric_state_diagonal(x, parms, packed_w, lower_bound, upper_bound)
    Pm = jax.block_until_ready(Pm)
    ref = _reference(x, parms, raw_params, lower_bound, upper_bound)
    assert Pm.shape == (n_dim, n_dim)
    assert jnp.allclose(Pm, ref, atol=1e-5, rtol=1e-5)

    # --- batched variant --------------------------------------------------------
    B = 16
    xb = jax.random.normal(kbx, (B, n_dim), jnp.float32)
    pb = jax.random.normal(kbs, (B, parm_dim), jnp.float32)
    Pm_b = parametric_state_diagonal_batched(xb, pb, packed_w,
                                             lower_bound, upper_bound)
    Pm_b = jax.block_until_ready(Pm_b)
    ref_b = jnp.stack([_reference(xb[i], pb[i], raw_params,
                                  lower_bound, upper_bound) for i in range(B)])
    assert Pm_b.shape == (B, n_dim, n_dim)
    assert jnp.allclose(Pm_b, ref_b, atol=1e-5, rtol=1e-5)

    print("KERNEL_OK")
</pallas_src>

<mosaic_0001>
module attributes {stable_mosaic.version = 11 : i64} {
  func.func @_mlp_diag_kernel(%arg0: i32, %arg1: memref<2xf32, #tpu.memory_space<smem>>, %arg2: memref<8x8xf32, #tpu.memory_space<vmem>>, %arg3: memref<8x8xf32, #tpu.memory_space<vmem>>, %arg4: memref<3x128x128xf32, #tpu.memory_space<vmem>>, %arg5: memref<8x128xf32, #tpu.memory_space<vmem>>) attributes {dimension_semantics = [#tpu.dimension_semantics<parallel>], iteration_bounds = array<i64: 1>, scalar_prefetch = 0 : i64, scratch_operands = 0 : i64, tpu.core_type = #tpu.core_type<tc>, window_params = [{transform_indices = @transform_0, window_bounds = array<i64: 2>}, {transform_indices = @transform_1, window_bounds = array<i64: 8, 8>}, {transform_indices = @transform_2, window_bounds = array<i64: 8, 8>}, {pipeline_mode = #tpu.pipeline_mode<synchronous>, transform_indices = @transform_3, window_bounds = array<i64: 3, 128, 128>}, {transform_indices = @transform_4, window_bounds = array<i64: 8, 128>}]} {
    %c0 = arith.constant 0 : index
    %0 = memref.load %arg1[%c0] : memref<2xf32, #tpu.memory_space<smem>>
    %c1 = arith.constant 1 : index
    %1 = memref.load %arg1[%c1] : memref<2xf32, #tpu.memory_space<smem>>
    %c0_0 = arith.constant 0 : index
    %2 = memref.load %arg1[%c0_0] : memref<2xf32, #tpu.memory_space<smem>>
    %3 = arith.subf %1, %2 : f32
    %c0_1 = arith.constant 0 : index
    %c0_2 = arith.constant 0 : index
    %c0_3 = arith.constant 0 : index
    %4 = vector.load %arg4[%c0_1, %c0_2, %c0_3] : memref<3x128x128xf32, #tpu.memory_space<vmem>>, vector<1x128x128xf32>
    %5 = vector.shape_cast %4 : vector<1x128x128xf32> to vector<128x128xf32>
    %c1_4 = arith.constant 1 : index
    %c0_5 = arith.constant 0 : index
    %c0_6 = arith.constant 0 : index
    %6 = vector.load %arg4[%c1_4, %c0_5, %c0_6] : memref<3x128x128xf32, #tpu.memory_space<vmem>>, vector<1x128x128xf32>
    %7 = vector.shape_cast %6 : vector<1x128x128xf32> to vector<128x128xf32>
    %c2 = arith.constant 2 : index
    %c0_7 = arith.constant 0 : index
    %c0_8 = arith.constant 0 : index
    %8 = vector.load %arg4[%c2, %c0_7, %c0_8] : memref<3x128x128xf32, #tpu.memory_space<vmem>>, vector<1x128x128xf32>
    %9 = vector.shape_cast %8 : vector<1x128x128xf32> to vector<128x128xf32>
    %c0_9 = arith.constant 0 : index
    %c0_10 = arith.constant 0 : index
    %10 = vector.load %arg2[%c0_9, %c0_10] : memref<8x8xf32, #tpu.memory_space<vmem>>, vector<8x8xf32>
    %11 = vector.extract_strided_slice %5 {offsets = [0, 0], sizes = [8, 128], strides = [1, 1]} : vector<128x128xf32> to vector<8x128xf32>
    %cst = arith.constant dense<0.000000e+00> : vector<8x128xf32>
    %12 = tpu.matmul %10, %11, %cst {dimension_numbers = #tpu.dot_dimension_numbers<[1], [0], [0], [1], [0, 0, 1, 1], [], []>} : vector<8x8xf32>, vector<8x128xf32>, vector<8x128xf32> -> vector<8x128xf32>
    %c0_11 = arith.constant 0 : index
    %c0_12 = arith.constant 0 : index
    %13 = vector.load %arg3[%c0_11, %c0_12] : memref<8x8xf32, #tpu.memory_space<vmem>>, vector<8x8xf32>
    %14 = vector.extract_strided_slice %5 {offsets = [8, 0], sizes = [8, 128], strides = [1, 1]} : vector<128x128xf32> to vector<8x128xf32>
    %cst_13 = arith.constant dense<0.000000e+00> : vector<8x128xf32>
    %15 = tpu.matmul %13, %14, %cst_13 {dimension_numbers = #tpu.dot_dimension_numbers<[1], [0], [0], [1], [0, 0, 1, 1], [], []>} : vector<8x8xf32>, vector<8x128xf32>, vector<8x128xf32> -> vector<8x128xf32>
    %16 = arith.addf %12, %15 : vector<8x128xf32>
    %17 = vector.extract_strided_slice %5 {offsets = [16, 0], sizes = [1, 128], strides = [1, 1]} : vector<128x128xf32> to vector<1x128xf32>
    %18 = vector.broadcast %17 : vector<1x128xf32> to vector<8x128xf32>
    %19 = arith.addf %16, %18 : vector<8x128xf32>
    %cst_14 = arith.constant 0.000000e+00 : f32
    %20 = vector.broadcast %cst_14 : f32 to vector<8x128xf32>
    %21 = arith.maximumf %19, %20 : vector<8x128xf32>
    %cst_15 = arith.constant dense<0.000000e+00> : vector<8x128xf32>
    %22 = tpu.matmul %21, %7, %cst_15 {dimension_numbers = #tpu.dot_dimension_numbers<[1], [0], [0], [1], [0, 0, 1, 1], [], []>} : vector<8x128xf32>, vector<128x128xf32>, vector<8x128xf32> -> vector<8x128xf32>
    %cst_16 = arith.constant 0.000000e+00 : f32
    %23 = vector.broadcast %cst_16 : f32 to vector<8x128xf32>
    %24 = arith.maximumf %22, %23 : vector<8x128xf32>
    %cst_17 = arith.constant dense<0.000000e+00> : vector<8x128xf32>
    %25 = tpu.matmul %24, %9, %cst_17 {dimension_numbers = #tpu.dot_dimension_numbers<[1], [0], [0], [1], [0, 0, 1, 1], [], []>} : vector<8x128xf32>, vector<128x128xf32>, vector<8x128xf32> -> vector<8x128xf32>
    %26 = arith.negf %25 : vector<8x128xf32>
    %27 = math.exp %26 : vector<8x128xf32>
    %cst_18 = arith.constant 1.000000e+00 : f32
    %28 = vector.broadcast %cst_18 : f32 to vector<8x128xf32>
    %29 = arith.addf %28, %27 : vector<8x128xf32>
    %30 = arith.divf %28, %29 : vector<8x128xf32>
    %31 = vector.broadcast %3 : f32 to vector<8x128xf32>
    %32 = arith.mulf %30, %31 : vector<8x128xf32>
    %33 = vector.broadcast %0 : f32 to vector<8x128xf32>
    %34 = arith.addf %33, %32 : vector<8x128xf32>
    %c0_19 = arith.constant 0 : index
    %c0_20 = arith.constant 0 : index
    %35 = vector.load %arg5[%c0_19, %c0_20] : memref<8x128xf32, #tpu.memory_space<vmem>>, vector<8x128xf32>
    tpu.vector_store %arg5[%c0_19, %c0_20], %34 {strides = array<i32>} : memref<8x128xf32, #tpu.memory_space<vmem>>, vector<8x128xf32>,
    return
  }
  func.func @transform_0(%arg0: i32) -> i32 {
    %c0_i32 = arith.constant 0 : i32
    %c0_i32_0 = arith.constant 0 : i32
    return %c0_i32 : i32
  }
  func.func @transform_1(%arg0: i32) -> (i32, i32) {
    %c0_i32 = arith.constant 0 : i32
    %c0_i32_0 = arith.constant 0 : i32
    return %arg0, %c0_i32 : i32, i32
  }
  func.func @transform_2(%arg0: i32) -> (i32, i32) {
    %c0_i32 = arith.constant 0 : i32
    %c0_i32_0 = arith.constant 0 : i32
    return %arg0, %c0_i32 : i32, i32
  }
  func.func @transform_3(%arg0: i32) -> (i32, i32, i32) {
    %c0_i32 = arith.constant 0 : i32
    %c0_i32_0 = arith.constant 0 : i32
    %c0_i32_1 = arith.constant 0 : i32
    %c0_i32_2 = arith.constant 0 : i32
    return %c0_i32, %c0_i32_0, %c0_i32_1 : i32, i32, i32
  }
  func.func @transform_4(%arg0: i32) -> (i32, i32) {
    %c0_i32 = arith.constant 0 : i32
    %c0_i32_0 = arith.constant 0 : i32
    return %arg0, %c0_i32 : i32, i32
  }
}

</mosaic_0001>

<llo_original>
// kernel: _diag_vectors.1
$region0: #{_diag_vectors.1}
  #allocation0 [shape = 'u32[]', space=smem, size = 0x4, offset = 0x4, fixed_abs, tag = 'smem constant byte address 0x4 - core index']
  #allocation1 [shape = 'u32[72,128]{1,0:T(1,128)}', space=vmem, size = 0x9000, scoped, tag = 'internal scratch']
  %s0 = inlined_call_operand.vmem [shape: f32[2], index: 0, kind: input, shape index: {}]
  %s1 = inlined_call_operand.vmem [shape: f32[8,8], index: 1, kind: input, shape index: {}]
  %s2 = inlined_call_operand.vmem [shape: f32[8,8], index: 2, kind: input, shape index: {}]
  %s3 = inlined_call_operand.hbm [shape: f32[3,128,128], index: 3, kind: input, shape index: {}]
  %s4 = inlined_call_operand.vmem [shape: f32[8,128], index: 4, kind: output, shape index: {}]
  %s5 = sld [smem:[#allocation0]]
  $region34: #{_diag_vectors.1} parent=0
    _
  %s7 = ssub.s32 1, %s5
  %s8 = scalar_select 0, %s7, %s5
  $region1: #{_diag_vectors.1} parent=0
    #allocation2 [shape = 'u8[512]{0}', space=smem, size = 0x200, scoped, tag = 'input window, operand 0, single buffered']
    #allocation3 [shape = 's32[1]{0}', space=sflag, size = 0x4, scoped, tag = 'scoped memory for _diag_vectors.1']
    #allocation4 [shape = 's32[1]{0}', space=sflag, size = 0x4, scoped, tag = 'scoped memory for _diag_vectors.1']
    #allocation5 [shape = 'u8[196608]{0}', space=vmem, size = 0x30000, scoped, tag = 'input window, operand 3, single buffered']
    %9 = vsyncpa [#allocation4], 0
    %10 = vsyncpa [#allocation3], 0
    // Predicated region
    $region2: #{_diag_vectors.1} parent=1 // pred_check
      _
    $region3: #{_diag_vectors.1} parent=1 // pred_check_branch
      %12 = sbr.rel (0) target = $region5
    $region4: #{_diag_vectors.1} parent=1 // pred_region
      %14 = vsyncadd [#allocation4], 0
      %s16 = sshll.u32 %s0, 4
      %s17 = int_to_ptr.vmem [resolvable:$true] %s16
      %19 = dma.vmem_to_smem %s17, 16, [#allocation2], [#allocation4]
    $region5: #{_diag_vectors.1} parent=1 // pred_fallthru
      _
    // Predicated region
    $region6: #{_diag_vectors.1} parent=1 // pred_check
      _
    $region7: #{_diag_vectors.1} parent=1 // pred_check_branch
      %21 = sbr.rel (0) target = $region9
    $region8: #{_diag_vectors.1} parent=1 // pred_region
      _
    $region9: #{_diag_vectors.1} parent=1 // pred_fallthru
      _
    // Predicated region
    $region10: #{_diag_vectors.1} parent=1 // pred_check
      _
    $region11: #{_diag_vectors.1} parent=1 // pred_check_branch
      %23 = sbr.rel (0) target = $region13
    $region12: #{_diag_vectors.1} parent=1 // pred_region
      _
    $region13: #{_diag_vectors.1} parent=1 // pred_fallthru
      _
    // Predicated region
    $region14: #{_diag_vectors.1} parent=1 // pred_check
      _
    $region15: #{_diag_vectors.1} parent=1 // pred_check_branch
      %25 = sbr.rel (0) target = $region17
    $region16: #{_diag_vectors.1} parent=1 // pred_region
      %27 = vsyncadd [#allocation3], 0
      %s28 = sshll.u32 %s3, 4
      %s29 = int_to_ptr.hbm [resolvable:$true] %s28
      %s30 = sshll.u32 [#allocation5], 4
      %s31 = int_to_ptr.vmem [resolvable:$true] %s30
      %36 = dma.hbm_to_vmem [thread:$0]  %s29, 6144, %s31, [#allocation3], 128, 128, 8
    $region17: #{_diag_vectors.1} parent=1 // pred_fallthru
      _
    // Predicated region
    $region18: #{_diag_vectors.1} parent=1 // pred_check
      _
    $region19: #{_diag_vectors.1} parent=1 // pred_check_branch
      %38 = sbr.rel (0) target = $region21
    $region20: #{_diag_vectors.1} parent=1 // pred_region
      %40 = dma.done [#allocation4], 16
    $region21: #{_diag_vectors.1} parent=1 // pred_fallthru
      _
    // Predicated region
    $region22: #{_diag_vectors.1} parent=1 // pred_check
      _
    $region23: #{_diag_vectors.1} parent=1 // pred_check_branch
      %42 = sbr.rel (0) target = $region25
    $region24: #{_diag_vectors.1} parent=1 // pred_region
      %44 = dma.done [#allocation3], 6144
    $region25: #{_diag_vectors.1} parent=1 // pred_fallthru
      _
    %45 = sfence
    %s46 = sld [smem:[#allocation2]]
    %s47 = sld [smem:[#allocation2 + $0x1]]
    %s48 = ssub.f32 %s47, %s46
    %v49 = vld [vmem:[#allocation5] sm:$0xff]
    %v50 = vld [vmem:[#allocation5 + $0x8] sm:$0xff]
    %v51 = vld [vmem:[#allocation5 + $0x10] sm:$0xff]
    %s52 = scalar_lea.vmem [#allocation5], 128
    %v53 = vld [vmem:[%s52] sm:$0xff]
    %v54 = vld [vmem:[%s52 + $0x8] sm:$0xff]
    %v55 = vld [vmem:[%s52 + $0x10] sm:$0xff]
    %v56 = vld [vmem:[%s52 + $0x18] sm:$0xff]
    %v57 = vld [vmem:[%s52 + $0x20] sm:$0xff]
    %v58 = vld [vmem:[%s52 + $0x28] sm:$0xff]
    %v59 = vld [vmem:[%s52 + $0x30] sm:$0xff]
    %v60 = vld [vmem:[%s52 + $0x38] sm:$0xff]
    %v61 = vld [vmem:[%s52 + $0x40] sm:$0xff]
    %v62 = vld [vmem:[%s52 + $0x48] sm:$0xff]
    %v63 = vld [vmem:[%s52 + $0x50] sm:$0xff]
    %v64 = vld [vmem:[%s52 + $0x58] sm:$0xff]
    %v65 = vld [vmem:[%s52 + $0x60] sm:$0xff]
    %v66 = vld [vmem:[%s52 + $0x68] sm:$0xff]
    %v67 = vld [vmem:[%s52 + $0x70] sm:$0xff]
    %v68 = vld [vmem:[%s52 + $0x78] sm:$0xff]
    %s69 = scalar_lea.vmem [#allocation5], 256
    %v70 = vld [vmem:[%s69] sm:$0xff]
    %v71 = vld [vmem:[%s69 + $0x8] sm:$0xff]
    %v72 = vld [vmem:[%s69 + $0x10] sm:$0xff]
    %v73 = vld [vmem:[%s69 + $0x18] sm:$0xff]
    %v74 = vld [vmem:[%s69 + $0x20] sm:$0xff]
    %v75 = vld [vmem:[%s69 + $0x28] sm:$0xff]
    %v76 = vld [vmem:[%s69 + $0x30] sm:$0xff]
    %v77 = vld [vmem:[%s69 + $0x38] sm:$0xff]
    %v78 = vld [vmem:[%s69 + $0x40] sm:$0xff]
    %v79 = vld [vmem:[%s69 + $0x48] sm:$0xff]
    %v80 = vld [vmem:[%s69 + $0x50] sm:$0xff]
    %v81 = vld [vmem:[%s69 + $0x58] sm:$0xff]
    %v82 = vld [vmem:[%s69 + $0x60] sm:$0xff]
    %v83 = vld [vmem:[%s69 + $0x68] sm:$0xff]
    %v84 = vld [vmem:[%s69 + $0x70] sm:$0xff]
    %v85 = vld [vmem:[%s69 + $0x78] sm:$0xff]
    %v86 = vld [vmem:[%s1] sm:$0xff]
    %v87 = vld [vmem:[%s2] sm:$0xff]
    %vm88 = vcmask 64512
    %v90 = vsel %vm88, %v87, 0
    %92 = vmatpush.msra.mxu0 0.0
    %93 = vmatpush.msra.mxu0 0.0
    %94 = vmatpush.msra.mxu0 0.0
    %95 = vmatpush.msra.mxu0 0.0
    %96 = vmatpush.msra.mxu0 0.0
    %97 = vmatpush.msra.mxu0 0.0
    %98 = vmatpush.msra.mxu0 0.0
    %99 = vmatpush.msra.mxu0 0.0
    %100 = vmatpush.msra.mxu0 0.0
    %101 = vmatpush.msra.mxu0 0.0
    %102 = vmatpush.msra.mxu0 0.0
    %103 = vmatpush.msra.mxu0 0.0
    %104 = vmatpush.msra.mxu0 0.0
    %105 = vmatpush.msra.mxu0 0.0
    %106 = vmatpush.msra.mxu0 0.0
    %107 = vmatpush.msra.mxu0 %v50
    %108 = vmatmul.f32.gmra.mxu0 %v90
    %v109 = vpop.f32.mrf.mxu0
    %v110 = vadd.f32 0.0, %v109
    %111 = vdwg.mxu0
    %v113 = vsel %vm88, %v86, 0
    %115 = vmatpush.msra.mxu0 0.0
    %116 = vmatpush.msra.mxu0 0.0
    %117 = vmatpush.msra.mxu0 0.0
    %118 = vmatpush.msra.mxu0 0.0
    %119 = vmatpush.msra.mxu0 0.0
    %120 = vmatpush.msra.mxu0 0.0
    %121 = vmatpush.msra.mxu0 0.0
    %122 = vmatpush.msra.mxu0 0.0
    %123 = vmatpush.msra.mxu0 0.0
    %124 = vmatpush.msra.mxu0 0.0
    %125 = vmatpush.msra.mxu0 0.0
    %126 = vmatpush.msra.mxu0 0.0
    %127 = vmatpush.msra.mxu0 0.0
    %128 = vmatpush.msra.mxu0 0.0
    %129 = vmatpush.msra.mxu0 0.0
    %130 = vmatpush.msra.mxu0 %v49
    %131 = vmatmul.f32.gmra.mxu0 %v113
    %v132 = vpop.f32.mrf.mxu0
    %v133 = vadd.f32 %v110, %v132
    %134 = vdwg.mxu0
    %v135 = vperm.slane %v51, 0
    %v136 = vadd.f32 %v133, %v135
    %v137 = vmax.f32 %v136, 0.0
    %138 = vmatpush.msra.mxu0 %v68
    %139 = vmatpush.msra.mxu0 %v67
    %140 = vmatpush.msra.mxu0 %v66
    %141 = vmatpush.msra.mxu0 %v65
    %142 = vmatpush.msra.mxu0 %v64
    %143 = vmatpush.msra.mxu0 %v63
    %144 = vmatpush.msra.mxu0 %v62
    %145 = vmatpush.msra.mxu0 %v61
    %146 = vmatpush.msra.mxu0 %v60
    %147 = vmatpush.msra.mxu0 %v59
    %148 = vmatpush.msra.mxu0 %v58
    %149 = vmatpush.msra.mxu0 %v57
    %150 = vmatpush.msra.mxu0 %v56
    %151 = vmatpush.msra.mxu0 %v55
    %152 = vmatpush.msra.mxu0 %v54
    %153 = vmatpush.msra.mxu0 %v53
    %154 = vmatmul.f32.gmra.mxu0 %v137
    %v155 = vpop.f32.mrf.mxu0
    %v156 = vadd.f32 0.0, %v155
    %157 = vdwg.mxu0
    %v158 = vmax.f32 %v156, 0.0
    %159 = vmatpush.msra.mxu0 %v85
    %160 = vmatpush.msra.mxu0 %v84
    %161 = vmatpush.msra.mxu0 %v83
    %162 = vmatpush.msra.mxu0 %v82
    %163 = vmatpush.msra.mxu0 %v81
    %164 = vmatpush.msra.mxu0 %v80
    %165 = vmatpush.msra.mxu0 %v79
    %166 = vmatpush.msra.mxu0 %v78
    %167 = vmatpush.msra.mxu0 %v77
    %168 = vmatpush.msra.mxu0 %v76
    %169 = vmatpush.msra.mxu0 %v75
    %170 = vmatpush.msra.mxu0 %v74
    %171 = vmatpush.msra.mxu0 %v73
    %172 = vmatpush.msra.mxu0 %v72
    %173 = vmatpush.msra.mxu0 %v71
    %174 = vmatpush.msra.mxu0 %v70
    %175 = vmatmul.f32.gmra.mxu0 %v158
    %v176 = vpop.f32.mrf.mxu0
    %v177 = vadd.f32 0.0, %v176
    %178 = vdwg.mxu0
    %v179 = vxor.u32 %v177, 2147483648
    %v180 = vmul.f32 %v179, 1.442695
    %v181 = vpow.pop %v180
    %v182 = vadd.f32 %v181, 1.0
    %v183 = vrcp.pop %v182
    %v184 = vmul.f32 %v182, %v183
    %v185 = vsub.f32 1.0, %v184
    %v186 = vmul.f32 %v183, %v185
    %v187 = vadd.f32 %v183, %v186
    %vm188 = vweird.f32 %v182
    %vm189 = vweird.f32 %v183
    %vm190 = vmor %vm188, %vm189
    %v191 = vsel %vm190, %v183, %v187
    %v192 = vand.u32 2147483647, %v182
    %vm193 = vcmp.eq.f32.partialorder %v192, 8.507059e+37
    %v194 = vand.u32 %v182, 2147483648
    %v195 = vor.u32 1.1754944e-38, %v194
    %v196 = vsel %vm193, %v195, %v191
    %v197 = vmul.f32 1.0, %v196
    %v198 = vstv %s48
    %v199 = vmul.f32 %v197, %v198
    %v200 = vstv %s46
    %v201 = vadd.f32 %v200, %v199
    %202 = vst [vmem:[%s4] sm:$0xff] %v201
    // Predicated region
    $region26: #{_diag_vectors.1} parent=1 // pred_check
      _
    $region27: #{_diag_vectors.1} parent=1 // pred_check_branch
      %204 = sbr.rel (0) target = $region29
    $region28: #{_diag_vectors.1} parent=1 // pred_region
      _
    $region29: #{_diag_vectors.1} parent=1 // pred_fallthru
      _
    // Predicated region
    $region30: #{_diag_vectors.1} parent=1 // pred_check
      _
    $region31: #{_diag_vectors.1} parent=1 // pred_check_branch
      %206 = sbr.rel (0) target = $region33
    $region32: #{_diag_vectors.1} parent=1 // pred_region
      _
    $region33: #{_diag_vectors.1} parent=1 // pred_fallthru
      _
    %207 = vsyncpa [#allocation3], 1
    %208 = vsyncpa [#allocation4], 1

</llo_original>
